<compile_context>
chip_gen: v7x
topology: tpu7x:2x2x1
jax: 0.10.0
libtpu: 0.0.40
codegen_flags: <defaults>
</compile_context>

<pallas_src>
import functools

import jax
import jax.numpy as jnp
from jax.experimental import pallas as pl
from jax.experimental.pallas import tpu as pltpu

LANE = 128     # lane width: feature paddings are multiples of this
SUBLANE = 8    # sublane width: batch tile is a multiple of this


def _round_up(x: int, m: int) -> int:
    return ((x + m - 1) // m) * m


def _mlp_kernel(x_ref, w_ref, b_ref, o_ref, *, n_layers: int, in_dim: int,
                padf: int, out_pad: int):
    # x_ref: (TM, in_dim) streamed      w_ref: (L, padf, padf) bf16, resident
    # b_ref: (L, 1, padf) f32, resident o_ref: (TM, out_pad)
    # The running activation `h` never leaves VMEM/vregs between layers.
    h = x_ref[...].astype(jnp.float32)
    k = in_dim
    for l in range(n_layers):  # static unroll, L is tiny
        n_cols = out_pad if l == n_layers - 1 else padf
        w = w_ref[l, :k, :n_cols]                     # static ref slice (free), bf16
        acc = jnp.dot(h.astype(w_ref.dtype), w,       # bf16 in, f32 MXU accumulate
                      preferred_element_type=jnp.float32)
        h = jnp.maximum(acc + b_ref[l, :, :n_cols], 0.0)  # f32 VPU epilogue
        k = n_cols
    o_ref[...] = h.astype(o_ref.dtype)


def init_linear_net_params(key, n_layers, in_dim, hid_dim, out_dim):
    """Deterministic init mirroring torch.nn.Linear default U(-1/sqrt(fan_in), +).
    Weights stored as (in, out) so the kernel computes X @ W (== X @ W_torch.T)."""
    params = []
    for i in range(n_layers):
        fan_in = in_dim if i == 0 else hid_dim
        fan_out = out_dim if i == n_layers - 1 else hid_dim
        key, kw, kb = jax.random.split(key, 3)
        bound = 1.0 / jnp.sqrt(jnp.float32(fan_in))
        w = jax.random.uniform(kw, (fan_in, fan_out), jnp.float32, -bound, bound)
        b = jax.random.uniform(kb, (fan_out,), jnp.float32, -bound, bound)
        params.append((w, b))
    return params


def pack_params(params, weight_dtype=jnp.bfloat16):
    """One-time layout prep (hoisted out of the forward pass): zero-pad every
    layer's (in, out) weight to a common lane-dense PADF, cast weights to bf16
    (MXU-native), keep biases in f32 for the VPU epilogue, stack all layers.
    Zero padding is exact: padded input lanes, weight rows/cols and bias lanes
    are all 0, so padded activations stay exactly 0 through ReLU."""
    dims = [params[0][0].shape[0]] + [w.shape[1] for (w, _) in params]
    padf = _round_up(max(dims), LANE)
    n_layers = len(params)
    w_stack = jnp.zeros((n_layers, padf, padf), weight_dtype)
    b_stack = jnp.zeros((n_layers, 1, padf), jnp.float32)
    for l, (w, b) in enumerate(params):
        w_stack = w_stack.at[l, : w.shape[0], : w.shape[1]].set(w.astype(weight_dtype))
        b_stack = b_stack.at[l, 0, : b.shape[0]].set(b.astype(jnp.float32))
    return {"w": w_stack, "b": b_stack, "in_dim": dims[0], "out_dim": dims[-1]}


def linear_net_forward(x: jax.Array, packed, dropout: float = 0.0, *,
                       tm_cap: int = 512, min_grid_steps: int = 4) -> jax.Array:
    """Maps X from [..., in_dim] to [..., out_dim]; ReLU after every layer
    (including the last), matching the PyTorch forward."""
    # TODO(synk): training-mode dropout (p>0) not implemented; p=0.0 is identity.
    w_stack, b_stack = packed["w"], packed["b"]
    in_dim, out_dim = packed["in_dim"], packed["out_dim"]
    n_layers, padf, _ = w_stack.shape
    out_pad = _round_up(out_dim, LANE)

    lead = x.shape[:-1]
    h = x.reshape(-1, x.shape[-1]).astype(jnp.float32)
    M, K = h.shape
    assert K == in_dim, (K, in_dim)

    # Batch tile: multiple of 8 sublanes, as large as the cap allows (the kernel
    # is an HBM-bound x/out stream), but shrunk so the grid keeps at least
    # `min_grid_steps` steps when M allows (>= 2 per TensorCore on v7x).
    M8 = _round_up(max(M, SUBLANE), SUBLANE)
    tm_for_steps = max(SUBLANE, (M8 // min_grid_steps) // SUBLANE * SUBLANE)
    TM = max(SUBLANE, min(tm_cap, tm_for_steps, M8))
    M_pad = _round_up(M, TM)

    # Pad rows only when required (no max-width feature padding, no padded copy
    # of x when M is already tile-aligned).
    x2 = h
    if M_pad != M:
        x2 = jnp.pad(x2, ((0, M_pad - M), (0, 0)))

    grid = (M_pad // TM,)

    # Explicit VMEM budget: double-buffered x/out streams, single-buffered
    # resident weights/biases, activation working set, plus headroom.
    vmem_bytes = (
        2 * TM * in_dim * 4            # x stream (f32, double-buffered)
        + 2 * TM * out_pad * 4         # out stream (f32, double-buffered)
        + 2 * TM * padf * 4            # hidden-activation working set headroom
        + n_layers * padf * padf * w_stack.dtype.itemsize   # resident weights
        + n_layers * padf * 4          # resident biases
    )
    vmem_limit = int(min(max(2 * vmem_bytes + (4 << 20), 8 << 20), 64 << 20))

    out = pl.pallas_call(
        functools.partial(_mlp_kernel, n_layers=n_layers, in_dim=in_dim,
                          padf=padf, out_pad=out_pad),
        out_shape=jax.ShapeDtypeStruct((M_pad, out_pad), jnp.float32),
        grid=grid,
        in_specs=[
            # x tile: streamed/pipelined, at its true feature width.
            pl.BlockSpec((TM, in_dim), lambda i: (i, 0)),
            # Weights/biases: VMEM-resident across the grid, single-buffered
            # (constant index_map => no prefetch needed, halves their VMEM).
            pl.BlockSpec((n_layers, padf, padf), lambda i: (0, 0, 0),
                         pipeline_mode=pl.Buffered(1)),
            pl.BlockSpec((n_layers, 1, padf), lambda i: (0, 0, 0),
                         pipeline_mode=pl.Buffered(1)),
        ],
        out_specs=pl.BlockSpec((TM, out_pad), lambda i: (i, 0)),
        compiler_params=pltpu.CompilerParams(
            dimension_semantics=("parallel",),  # shard M tiles across TCs (v7x)
            vmem_limit_bytes=vmem_limit,
        ),
    )(x2, w_stack, b_stack)

    y = out[:M, :out_dim]
    return y.reshape(*lead, out_dim).astype(x.dtype)


def linear_net_reference(x: jax.Array, params) -> jax.Array:
    """Pure-JAX f32 reference matching the PyTorch module (ReLU after every layer)."""
    h = x.astype(jnp.float32)
    for (w, b) in params:
        h = jnp.maximum(h @ w + b, 0.0)
    return h


def linear_net_reference_bf16(x: jax.Array, params) -> jax.Array:
    """Reference mirroring the kernel's numerics (bf16 matmul inputs, f32 acc/epilogue)."""
    h = x.astype(jnp.float32)
    for (w, b) in params:
        acc = jnp.dot(h.astype(jnp.bfloat16), w.astype(jnp.bfloat16),
                      preferred_element_type=jnp.float32)
        h = jnp.maximum(acc + b.astype(jnp.float32), 0.0)
    return h


if __name__ == "__main__":
    n_layers, in_dim, hid_dim, out_dim = 3, 16, 32, 8
    key = jax.random.PRNGKey(0)
    key, kx = jax.random.split(key)

    params = init_linear_net_params(key, n_layers, in_dim, hid_dim, out_dim)
    packed = pack_params(params)  # one-time padding/stacking/bf16 cast, out of the fwd path

    x = jax.random.normal(kx, (2, 8, in_dim), dtype=jnp.float32)  # [..., in_dim]

    fwd = jax.jit(lambda xin: linear_net_forward(xin, packed))
    y = jax.block_until_ready(fwd(x))

    assert y.shape == (2, 8, out_dim), y.shape
    assert bool(jnp.all(jnp.isfinite(y)))
    assert bool(jnp.all(y >= 0.0))  # ReLU applied after the final layer too

    # Numerics-matched check (bf16 matmul inputs on both sides).
    y_bf16 = linear_net_reference_bf16(x, params)
    assert jnp.allclose(y, y_bf16, rtol=5e-3, atol=5e-3), \
        float(jnp.max(jnp.abs(y - y_bf16)))

    # Semantic check against the full-f32 PyTorch-equivalent reference
    # (tolerance loosened for bf16 weights per the review).
    y_ref = linear_net_reference(x, params)
    assert jnp.allclose(y, y_ref, rtol=3e-2, atol=3e-2), \
        float(jnp.max(jnp.abs(y - y_ref)))

    print("KERNEL_OK")
</pallas_src>

<mosaic_0001>
module attributes {stable_mosaic.version = 11 : i64} {
  func.func @_mlp_kernel(%arg0: i32, %arg1: memref<8x16xf32, #tpu.memory_space<vmem>>, %arg2: memref<3x128x128xbf16, #tpu.memory_space<vmem>>, %arg3: memref<3x1x128xf32, #tpu.memory_space<vmem>>, %arg4: memref<8x128xf32, #tpu.memory_space<vmem>>) attributes {dimension_semantics = [#tpu.dimension_semantics<parallel>], iteration_bounds = array<i64: 2>, scalar_prefetch = 0 : i64, scratch_operands = 0 : i64, tpu.core_type = #tpu.core_type<tc>, window_params = [{transform_indices = @transform_0, window_bounds = array<i64: 8, 16>}, {pipeline_mode = #tpu.pipeline_mode<synchronous>, transform_indices = @transform_1, window_bounds = array<i64: 3, 128, 128>}, {pipeline_mode = #tpu.pipeline_mode<synchronous>, transform_indices = @transform_2, window_bounds = array<i64: 3, 1, 128>}, {transform_indices = @transform_3, window_bounds = array<i64: 8, 128>}]} {
    %c0 = arith.constant 0 : index
    %c0_0 = arith.constant 0 : index
    %0 = vector.load %arg1[%c0, %c0_0] : memref<8x16xf32, #tpu.memory_space<vmem>>, vector<8x16xf32>
    %c0_1 = arith.constant 0 : index
    %c0_2 = arith.constant 0 : index
    %c0_3 = arith.constant 0 : index
    %1 = vector.load %arg2[%c0_1, %c0_2, %c0_3] : memref<3x128x128xbf16, #tpu.memory_space<vmem>>, vector<1x16x128xbf16>
    %2 = vector.shape_cast %1 : vector<1x16x128xbf16> to vector<16x128xbf16>
    %3 = arith.truncf %0 : vector<8x16xf32> to vector<8x16xbf16>
    %cst = arith.constant dense<0.000000e+00> : vector<8x128xf32>
    %4 = tpu.matmul %3, %2, %cst {dimension_numbers = #tpu.dot_dimension_numbers<[1], [0], [0], [1], [0, 0, 1, 1], [], []>} : vector<8x16xbf16>, vector<16x128xbf16>, vector<8x128xf32> -> vector<8x128xf32>
    %c0_4 = arith.constant 0 : index
    %c0_5 = arith.constant 0 : index
    %c0_6 = arith.constant 0 : index
    %5 = vector.load %arg3[%c0_4, %c0_5, %c0_6] : memref<3x1x128xf32, #tpu.memory_space<vmem>>, vector<1x1x128xf32>
    %6 = vector.shape_cast %5 : vector<1x1x128xf32> to vector<1x128xf32>
    %7 = vector.broadcast %6 : vector<1x128xf32> to vector<8x128xf32>
    %8 = arith.addf %4, %7 : vector<8x128xf32>
    %cst_7 = arith.constant 0.000000e+00 : f32
    %9 = vector.broadcast %cst_7 : f32 to vector<8x128xf32>
    %10 = arith.maximumf %8, %9 : vector<8x128xf32>
    %c1 = arith.constant 1 : index
    %c0_8 = arith.constant 0 : index
    %c0_9 = arith.constant 0 : index
    %11 = vector.load %arg2[%c1, %c0_8, %c0_9] : memref<3x128x128xbf16, #tpu.memory_space<vmem>>, vector<1x128x128xbf16>
    %12 = vector.shape_cast %11 : vector<1x128x128xbf16> to vector<128x128xbf16>
    %13 = arith.truncf %10 : vector<8x128xf32> to vector<8x128xbf16>
    %cst_10 = arith.constant dense<0.000000e+00> : vector<8x128xf32>
    %14 = tpu.matmul %13, %12, %cst_10 {dimension_numbers = #tpu.dot_dimension_numbers<[1], [0], [0], [1], [0, 0, 1, 1], [], []>} : vector<8x128xbf16>, vector<128x128xbf16>, vector<8x128xf32> -> vector<8x128xf32>
    %c1_11 = arith.constant 1 : index
    %c0_12 = arith.constant 0 : index
    %c0_13 = arith.constant 0 : index
    %15 = vector.load %arg3[%c1_11, %c0_12, %c0_13] : memref<3x1x128xf32, #tpu.memory_space<vmem>>, vector<1x1x128xf32>
    %16 = vector.shape_cast %15 : vector<1x1x128xf32> to vector<1x128xf32>
    %17 = vector.broadcast %16 : vector<1x128xf32> to vector<8x128xf32>
    %18 = arith.addf %14, %17 : vector<8x128xf32>
    %cst_14 = arith.constant 0.000000e+00 : f32
    %19 = vector.broadcast %cst_14 : f32 to vector<8x128xf32>
    %20 = arith.maximumf %18, %19 : vector<8x128xf32>
    %c2 = arith.constant 2 : index
    %c0_15 = arith.constant 0 : index
    %c0_16 = arith.constant 0 : index
    %21 = vector.load %arg2[%c2, %c0_15, %c0_16] : memref<3x128x128xbf16, #tpu.memory_space<vmem>>, vector<1x128x128xbf16>
    %22 = vector.shape_cast %21 : vector<1x128x128xbf16> to vector<128x128xbf16>
    %23 = arith.truncf %20 : vector<8x128xf32> to vector<8x128xbf16>
    %cst_17 = arith.constant dense<0.000000e+00> : vector<8x128xf32>
    %24 = tpu.matmul %23, %22, %cst_17 {dimension_numbers = #tpu.dot_dimension_numbers<[1], [0], [0], [1], [0, 0, 1, 1], [], []>} : vector<8x128xbf16>, vector<128x128xbf16>, vector<8x128xf32> -> vector<8x128xf32>
    %c2_18 = arith.constant 2 : index
    %c0_19 = arith.constant 0 : index
    %c0_20 = arith.constant 0 : index
    %25 = vector.load %arg3[%c2_18, %c0_19, %c0_20] : memref<3x1x128xf32, #tpu.memory_space<vmem>>, vector<1x1x128xf32>
    %26 = vector.shape_cast %25 : vector<1x1x128xf32> to vector<1x128xf32>
    %27 = vector.broadcast %26 : vector<1x128xf32> to vector<8x128xf32>
    %28 = arith.addf %24, %27 : vector<8x128xf32>
    %cst_21 = arith.constant 0.000000e+00 : f32
    %29 = vector.broadcast %cst_21 : f32 to vector<8x128xf32>
    %30 = arith.maximumf %28, %29 : vector<8x128xf32>
    %c0_22 = arith.constant 0 : index
    %c0_23 = arith.constant 0 : index
    %31 = vector.load %arg4[%c0_22, %c0_23] : memref<8x128xf32, #tpu.memory_space<vmem>>, vector<8x128xf32>
    tpu.vector_store %arg4[%c0_22, %c0_23], %30 {strides = array<i32>} : memref<8x128xf32, #tpu.memory_space<vmem>>, vector<8x128xf32>,
    return
  }
  func.func @transform_0(%arg0: i32) -> (i32, i32) {
    %c0_i32 = arith.constant 0 : i32
    %c0_i32_0 = arith.constant 0 : i32
    return %arg0, %c0_i32 : i32, i32
  }
  func.func @transform_1(%arg0: i32) -> (i32, i32, i32) {
    %c0_i32 = arith.constant 0 : i32
    %c0_i32_0 = arith.constant 0 : i32
    %c0_i32_1 = arith.constant 0 : i32
    %c0_i32_2 = arith.constant 0 : i32
    return %c0_i32, %c0_i32_0, %c0_i32_1 : i32, i32, i32
  }
  func.func @transform_2(%arg0: i32) -> (i32, i32, i32) {
    %c0_i32 = arith.constant 0 : i32
    %c0_i32_0 = arith.constant 0 : i32
    %c0_i32_1 = arith.constant 0 : i32
    %c0_i32_2 = arith.constant 0 : i32
    return %c0_i32, %c0_i32_0, %c0_i32_1 : i32, i32, i32
  }
  func.func @transform_3(%arg0: i32) -> (i32, i32) {
    %c0_i32 = arith.constant 0 : i32
    %c0_i32_0 = arith.constant 0 : i32
    return %arg0, %c0_i32 : i32, i32
  }
}

</mosaic_0001>

<llo_original>
// kernel: _lambda_.1
$region0: #{_lambda_.1}
  #allocation0 [shape = 'u32[]', space=smem, size = 0x4, offset = 0x4, fixed_abs, tag = 'smem constant byte address 0x4 - core index']
  #allocation1 [shape = 'u32[144,128]{1,0:T(1,128)}', space=vmem, size = 0x12000, scoped, tag = 'internal scratch']
  %s0 = inlined_call_operand.hbm [shape: f32[16,16], index: 0, kind: input, shape index: {}]
  %s1 = inlined_call_operand.hbm [shape: bf16[3,128,128], index: 1, kind: input, shape index: {}]
  %s2 = inlined_call_operand.vmem [shape: f32[3,1,128], index: 2, kind: input, shape index: {}]
  %s3 = inlined_call_operand.vmem [shape: f32[16,128], index: 3, kind: output, shape index: {}]
  %s4 = sld [smem:[#allocation0]]
  $region53: #{_lambda_.1} parent=0
    _
  %s6 = ssub.s32 1, %s4
  %s7 = scalar_select 0, %s6, %s4
  $region1: #{_lambda_.1} parent=0
    #allocation2 [shape = 'u8[8192]{0}', space=vmem, size = 0x2000, scoped, tag = 'input window, operand 0']
    #allocation3 [shape = 's32[2]{0}', space=sflag, size = 0x8, scoped, tag = 'scoped memory for _lambda_.1']
    #allocation4 [shape = 'u8[98304]{0}', space=vmem, size = 0x18000, scoped, tag = 'input window, operand 1, single buffered']
    #allocation5 [shape = 's32[1]{0}', space=sflag, size = 0x4, scoped, tag = 'scoped memory for _lambda_.1']
    %8 = vsyncpa [#allocation3], 0
    %s9 = scalar_lea.sflag [#allocation3], 1
    %10 = vsyncpa %s9, 0
    %11 = vsyncpa [#allocation5], 0
    loop: start=0, step=1, limit=4
    $region2: #{_lambda_.1} parent=1 // loop_pre_header
      _
    $region3: #{_lambda_.1} parent=1 // loop_header
      %s13 = sphi 0, %s17
      %p14 = scmp.ge.s32.totalorder %s13, 4
      %s23 = sphi 0, %s25
      %s26 = sphi 0, %s23
      %s27 = sphi 0, %s26
      %s43 = sphi 0, %s27
      %s47 = sphi 0, %s47
      %s49 = sphi 0, %s47
      %s50 = sphi 0, %s49
      %s64 = sphi 0, %s50
      %s68 = sphi 0, %s68
      %s70 = sphi 0, %s68
      %s71 = sphi 0, %s70
      %s85 = sphi 0, %s71
      %s91 = sphi 0, %s93
      %s94 = sphi 0, %s91
      %s95 = sphi 0, %s94
      %s111 = sphi 0, %s95
    $region4: #{_lambda_.1} parent=1 // loop_header_branch
      %16 = sbr.rel (%p14) target = $region8
    $region5: #{_lambda_.1} parent=1 // loop_body
      %s18 = ssub.s32 %s13, 1
      %s19 = ssub.s32 %s13, 2
      %s20 = sadd.s32 %s13, 1
      %s21 = ssub.s32 %s13, %s20
      %p22 = scmp.eq.s32.totalorder %s21, 0
      %s24 = sadd.s32 %s23, 1
      %s25 = scalar_select %p22, %s23, %s24
      %p28 = pneg %p22
      %p29 = scmp.eq.s32.totalorder %s13, 1
      %p30 = por %p28, %p29
      %p31 = scmp.ne.s32.totalorder %s23, %s26
      %p32 = scmp.eq.s32.totalorder %s13, 0
      %p33 = por %p31, %p32
      %p34 = scmp.ne.s32.totalorder %s23, %s26
      %p35 = scmp.eq.s32.totalorder %s18, 1
      %p36 = por %p34, %p35
      %p37 = scmp.ne.s32.totalorder %s26, %s27
      %p38 = scmp.eq.s32.totalorder %s18, 0
      %p39 = por %p37, %p38
      %p40 = scmp.ne.s32.totalorder %s26, %s27
      %p41 = scmp.eq.s32.totalorder %s19, 1
      %p42 = por %p40, %p41
      %p44 = scmp.ne.s32.totalorder %s27, %s43
      %p45 = scmp.eq.s32.totalorder %s19, 0
      %p46 = por %p44, %p45
      %s48 = sadd.s32 %s47, 1
      %p51 = scmp.eq.s32.totalorder %s13, 1
      %p52 = scmp.ne.s32.totalorder %s47, %s49
      %p53 = scmp.eq.s32.totalorder %s13, 0
      %p54 = por %p52, %p53
      %p55 = scmp.ne.s32.totalorder %s47, %s49
      %p56 = scmp.eq.s32.totalorder %s18, 1
      %p57 = por %p55, %p56
      %p58 = scmp.ne.s32.totalorder %s49, %s50
      %p59 = scmp.eq.s32.totalorder %s18, 0
      %p60 = por %p58, %p59
      %p61 = scmp.ne.s32.totalorder %s49, %s50
      %p62 = scmp.eq.s32.totalorder %s19, 1
      %p63 = por %p61, %p62
      %p65 = scmp.ne.s32.totalorder %s50, %s64
      %p66 = scmp.eq.s32.totalorder %s19, 0
      %p67 = por %p65, %p66
      %s69 = sadd.s32 %s68, 1
      %p72 = scmp.eq.s32.totalorder %s13, 1
      %p73 = scmp.ne.s32.totalorder %s68, %s70
      %p74 = scmp.eq.s32.totalorder %s13, 0
      %p75 = por %p73, %p74
      %p76 = scmp.ne.s32.totalorder %s68, %s70
      %p77 = scmp.eq.s32.totalorder %s18, 1
      %p78 = por %p76, %p77
      %p79 = scmp.ne.s32.totalorder %s70, %s71
      %p80 = scmp.eq.s32.totalorder %s18, 0
      %p81 = por %p79, %p80
      %p82 = scmp.ne.s32.totalorder %s70, %s71
      %p83 = scmp.eq.s32.totalorder %s19, 1
      %p84 = por %p82, %p83
      %p86 = scmp.ne.s32.totalorder %s71, %s85
      %p87 = scmp.eq.s32.totalorder %s19, 0
      %p88 = por %p86, %p87
      %s89 = ssub.s32 %s13, %s20
      %p90 = scmp.eq.s32.totalorder %s89, 0
      %s92 = sadd.s32 %s91, 1
      %s93 = scalar_select %p90, %s91, %s92
      %p96 = pneg %p90
      %p97 = scmp.eq.s32.totalorder %s13, 1
      %p98 = por %p96, %p97
      %p99 = scmp.ne.s32.totalorder %s91, %s94
      %p100 = scmp.eq.s32.totalorder %s13, 0
      %p101 = por %p99, %p100
      %p102 = scmp.ne.s32.totalorder %s91, %s94
      %p103 = scmp.eq.s32.totalorder %s18, 1
      %p104 = por %p102, %p103
      %p105 = scmp.ne.s32.totalorder %s94, %s95
      %p106 = scmp.eq.s32.totalorder %s18, 0
      %p107 = por %p105, %p106
      %p108 = scmp.ne.s32.totalorder %s94, %s95
      %p109 = scmp.eq.s32.totalorder %s19, 1
      %p110 = por %p108, %p109
      %p112 = scmp.ne.s32.totalorder %s95, %s111
      %p113 = scmp.eq.s32.totalorder %s19, 0
      %p114 = por %p112, %p113
      %p115 = scmp.le.s32.totalorder 1, %s13
      %p116 = scmp.lt.s32.totalorder %s13, 3
      %p117 = pnand %p115, %p116
      %p118 = pneg %p117
      // Predicated region
      $region9: #{_lambda_.1} parent=5 // pred_check
        _
      $region10: #{_lambda_.1} parent=5 // pred_check_branch
        %120 = sbr.rel (%p117) target = $region12
      $region11: #{_lambda_.1} parent=5 // pred_region
        %s121 = ssub.s32 %s13, 1
        // Predicated region
        $region13: #{_lambda_.1} parent=11 // pred_check
          %p122 = pneg %p60
        $region14: #{_lambda_.1} parent=11 // pred_check_branch
          %124 = sbr.rel (%p122) target = $region16
        $region15: #{_lambda_.1} parent=11 // pred_region
          %s126 = ssub.s32 3072, 3072
          %127 = vsyncadd [#allocation5], %s126
          %s128 = sshll.u32 [#allocation4], 4
          %s129 = int_to_ptr.vmem [resolvable:$true] %s128
          %134 = dma.hbm_to_vmem [thread:$0]  %s1, 3072, %s129, [#allocation5], 64, 64, 4
        $region16: #{_lambda_.1} parent=11 // pred_fallthru
          _
        // Predicated region
        $region17: #{_lambda_.1} parent=11 // pred_check
          %p135 = pneg %p81
        $region18: #{_lambda_.1} parent=11 // pred_check_branch
          %137 = sbr.rel (%p135) target = $region20
        $region19: #{_lambda_.1} parent=11 // pred_region
          _
        $region20: #{_lambda_.1} parent=11 // pred_fallthru
          _
      $region12: #{_lambda_.1} parent=5 // pred_fallthru
        _
      %p138 = scmp.lt.s32.totalorder %s13, 2
      // Predicated region
      $region21: #{_lambda_.1} parent=5 // pred_check
        %p139 = pneg %p138
      $region22: #{_lambda_.1} parent=5 // pred_check_branch
        %141 = sbr.rel (%p139) target = $region24
      $region23: #{_lambda_.1} parent=5 // pred_region
        // Predicated region
        $region25: #{_lambda_.1} parent=23 // pred_check
          %p142 = pneg %p33
        $region26: #{_lambda_.1} parent=23 // pred_check_branch
          %144 = sbr.rel (%p142) target = $region28
        $region27: #{_lambda_.1} parent=23 // pred_region
          %s145 = sand.u32 %s23, 1
          %s146 = scalar_lea.sflag [#allocation3], %s145
          %s147 = sand.u32 %s23, 1
          %s148 = smul.addr %s147, 8
          %s149 = scalar_lea.vmem [#allocation2], %s148
          %s151 = ssub.s32 128, 128
          %152 = vsyncadd %s146, %s151
          %s153 = smul.addr %s13, 128
          %s154 = scalar_lea.hbm %s0, %s153
          %s156 = sshll.u32 %s149, 4
          %s157 = int_to_ptr.vmem [resolvable:$true] %s156
          %159 = dma.hbm_to_vmem [thread:$0]  %s154, 128, %s157, %s146
        $region28: #{_lambda_.1} parent=23 // pred_fallthru
          _
      $region24: #{_lambda_.1} parent=5 // pred_fallthru
        _
      %p160 = scmp.le.s32.totalorder 1, %s13
      %p161 = scmp.lt.s32.totalorder %s13, 3
      %p162 = pnand %p160, %p161
      %p163 = pneg %p162
      // Predicated region
      $region29: #{_lambda_.1} parent=5 // pred_check
        _
      $region30: #{_lambda_.1} parent=5 // pred_check_branch
        %165 = sbr.rel (%p162) target = $region32
      $region31: #{_lambda_.1} parent=5 // pred_region
        %s166 = ssub.s32 %s13, 1
        %s167 = sand.u32 %s26, 1
        %s168 = scalar_lea.sflag [#allocation3], %s167
        %s169 = sand.u32 %s26, 1
        %s170 = smul.addr %s169, 8
        %s171 = scalar_lea.vmem [#allocation2], %s170
        // Predicated region
        $region33: #{_lambda_.1} parent=31 // pred_check
          %p172 = pneg %p39
        $region34: #{_lambda_.1} parent=31 // pred_check_branch
          %174 = sbr.rel (%p172) target = $region36
        $region35: #{_lambda_.1} parent=31 // pred_region
          %175 = dma.done %s168, 128
        $region36: #{_lambda_.1} parent=31 // pred_fallthru
          _
        // Predicated region
        $region37: #{_lambda_.1} parent=31 // pred_check
          %p176 = pneg %p60
        $region38: #{_lambda_.1} parent=31 // pred_check_branch
          %178 = sbr.rel (%p176) target = $region40
        $region39: #{_lambda_.1} parent=31 // pred_region
          %179 = dma.done [#allocation5], 3072
        $region40: #{_lambda_.1} parent=31 // pred_fallthru
          _
        %s180 = sand.u32 %s26, 1
        %s181 = scalar_lea.sflag [#allocation3], %s180
        %s182 = sand.u32 %s26, 1
        %s183 = smul.addr %s182, 8
        %s184 = scalar_lea.vmem [#allocation2], %s183
        %p185 = pneg %p39
        %p186 = pneg %p36
        %p187 = pneg %p60
        %p188 = pneg %p57
        %p189 = pneg %p81
        %p190 = pneg %p78
        %p191 = pneg %p107
        %p192 = pneg %p104
        %p193 = scmp.lt.s32.totalorder %s18, 1
        %s194 = scalar_select %p193, %s18, 1
        %s195 = smul.addr %s194, 8
        %s196 = scalar_lea.vmem %s3, %s195
        %p197 = scmp.lt.s32.totalorder %s18, 1
        %s198 = scalar_select %p197, %s18, 1
        %s199 = smul.addr %s198, 8
        %s200 = scalar_lea.vmem %s3, %s199
        %v202 = vld [vmem:[%s171] sm:$0xff]
        %v203 = vld [vmem:[#allocation4] sm:$0xf]
        %v204 = vld [vmem:[#allocation4 + $0x4] sm:$0xf]
        %v205 = vpack.c.bf16 %v202, %v202
        %v206 = vld [vmem:[%s2] sm:$0x1]
        %v208 = vlaneseq
        %v209 = vshrl.u32 %v208, 7
        %v210 = vsub.s32 0, %v209
        %v211 = vrot.slane %v206, %v210
        %v215 = vunpack.c.l.b16 %v203
        %v216 = vunpack.c.l.b16 %v204
        %v217 = vpack.c.b16 %v216, %v215
        %vm219 = vcmask 130048
        %v221 = vsel %vm219, %v205, 0
        %223 = vmatprep.subr.bf16.mxu0 0
        %224 = vmatpush1.bf16.msra.mxu0 %v217
        %225 = vmatprep.subr.bf16.mxu0 0
        %226 = vmatpush1.bf16.msra.mxu0 0
        %227 = vmatprep.subr.bf16.mxu0 0
        %228 = vmatpush1.bf16.msra.mxu0 0
        %229 = vmatprep.subr.bf16.mxu0 0
        %230 = vmatpush1.bf16.msra.mxu0 0
        %231 = vmatprep.subr.bf16.mxu0 0
        %232 = vmatpush1.bf16.msra.mxu0 0
        %233 = vmatprep.subr.bf16.mxu0 0
        %234 = vmatpush1.bf16.msra.mxu0 0
        %235 = vmatprep.subr.bf16.mxu0 0
        %236 = vmatpush1.bf16.msra.mxu0 0
        %237 = vmatprep.subr.bf16.mxu0 0
        %238 = vmatpush1.bf16.msra.mxu0 0
        %239 = vmatprep.subr.bf16.mxu0 0
        %240 = vmatpush1.bf16.msra.mxu0 0
        %241 = vmatprep.subr.bf16.mxu0 0
        %242 = vmatpush1.bf16.msra.mxu0 0
        %243 = vmatprep.subr.bf16.mxu0 0
        %244 = vmatpush1.bf16.msra.mxu0 0
        %245 = vmatprep.subr.bf16.mxu0 0
        %246 = vmatpush1.bf16.msra.mxu0 0
        %247 = vmatprep.subr.bf16.mxu0 0
        %248 = vmatpush1.bf16.msra.mxu0 0
        %249 = vmatprep.subr.bf16.mxu0 0
        %250 = vmatpush1.bf16.msra.mxu0 0
        %251 = vmatprep.subr.bf16.mxu0 0
        %252 = vmatpush1.bf16.msra.mxu0 0
        %253 = vmatprep.subr.bf16.mxu0 0
        %254 = vmatpush1.bf16.msra.mxu0 0
        %255 = vmatprep.mubr.bf16.mxu0 0
        %256 = vmatmul.mubr.bf16.gmra.mrb[0].mxu0 %v221
        %v257 = vpop.f32.mrb[0].mxu0
        %v258 = vadd.f32 %v211, %v257
        %v259 = vpop.f32.mrb[0].mxu0
        %v260 = vpop.f32.mrb[0].mxu0
        %v261 = vpop.f32.mrb[0].mxu0
        %262 = vdwg.mxu0
        %v263 = vmax.f32 %v258, 0.0
        %s264 = scalar_lea.vmem [#allocation4], 64
        %v265 = vld [vmem:[%s264] sm:$0xf]
        %v266 = vld [vmem:[%s264 + $0x4] sm:$0xf]
        %v267 = vld [vmem:[%s264 + $0x8] sm:$0xf]
        %v268 = vld [vmem:[%s264 + $0xc] sm:$0xf]
        %v269 = vld [vmem:[%s264 + $0x10] sm:$0xf]
        %v270 = vld [vmem:[%s264 + $0x14] sm:$0xf]
        %v271 = vld [vmem:[%s264 + $0x18] sm:$0xf]
        %v272 = vld [vmem:[%s264 + $0x1c] sm:$0xf]
        %v273 = vld [vmem:[%s264 + $0x20] sm:$0xf]
        %v274 = vld [vmem:[%s264 + $0x24] sm:$0xf]
        %v275 = vld [vmem:[%s264 + $0x28] sm:$0xf]
        %v276 = vld [vmem:[%s264 + $0x2c] sm:$0xf]
        %v277 = vld [vmem:[%s264 + $0x30] sm:$0xf]
        %v278 = vld [vmem:[%s264 + $0x34] sm:$0xf]
        %v279 = vld [vmem:[%s264 + $0x38] sm:$0xf]
        %v280 = vld [vmem:[%s264 + $0x3c] sm:$0xf]
        %v281 = vpack.c.bf16 %v263, %v263
        %s282 = scalar_lea.vmem %s2, 1
        %v283 = vld [vmem:[%s282] sm:$0x1]
        %v285 = vlaneseq
        %v286 = vshrl.u32 %v285, 7
        %v287 = vsub.s32 0, %v286
        %v288 = vrot.slane %v283, %v287
        %v306 = vunpack.c.l.b16 %v265
        %v307 = vunpack.c.l.b16 %v266
        %v308 = vunpack.c.l.b16 %v267
        %v309 = vunpack.c.l.b16 %v268
        %v310 = vunpack.c.l.b16 %v269
        %v311 = vunpack.c.l.b16 %v270
        %v312 = vunpack.c.l.b16 %v271
        %v313 = vunpack.c.l.b16 %v272
        %v314 = vunpack.c.l.b16 %v273
        %v315 = vunpack.c.l.b16 %v274
        %v316 = vunpack.c.l.b16 %v275
        %v317 = vunpack.c.l.b16 %v276
        %v318 = vunpack.c.l.b16 %v277
        %v319 = vunpack.c.l.b16 %v278
        %v320 = vunpack.c.l.b16 %v279
        %v321 = vunpack.c.l.b16 %v280
        %v322 = vpack.c.b16 %v307, %v306
        %v323 = vpack.c.b16 %v309, %v308
        %v324 = vpack.c.b16 %v311, %v310
        %v325 = vpack.c.b16 %v313, %v312
        %v326 = vpack.c.b16 %v315, %v314
        %v327 = vpack.c.b16 %v317, %v316
        %v328 = vpack.c.b16 %v319, %v318
        %v329 = vpack.c.b16 %v321, %v320
        %338 = vmatprep.subr.bf16.mxu0 0
        %339 = vmatpush1.bf16.msra.mxu0 %v322
        %340 = vmatprep.subr.bf16.mxu0 0
        %341 = vmatpush1.bf16.msra.mxu0 %v323
        %342 = vmatprep.subr.bf16.mxu0 0
        %343 = vmatpush1.bf16.msra.mxu0 %v324
        %344 = vmatprep.subr.bf16.mxu0 0
        %345 = vmatpush1.bf16.msra.mxu0 %v325
        %346 = vmatprep.subr.bf16.mxu0 0
        %347 = vmatpush1.bf16.msra.mxu0 %v326
        %348 = vmatprep.subr.bf16.mxu0 0
        %349 = vmatpush1.bf16.msra.mxu0 %v327
        %350 = vmatprep.subr.bf16.mxu0 0
        %351 = vmatpush1.bf16.msra.mxu0 %v328
        %352 = vmatprep.subr.bf16.mxu0 0
        %353 = vmatpush1.bf16.msra.mxu0 %v329
        %354 = vmatprep.subr.bf16.mxu0 0
        %355 = vmatpush1.bf16.msra.mxu0 0
        %356 = vmatprep.subr.bf16.mxu0 0
        %357 = vmatpush1.bf16.msra.mxu0 0
        %358 = vmatprep.subr.bf16.mxu0 0
        %359 = vmatpush1.bf16.msra.mxu0 0
        %360 = vmatprep.subr.bf16.mxu0 0
        %361 = vmatpush1.bf16.msra.mxu0 0
        %362 = vmatprep.subr.bf16.mxu0 0
        %363 = vmatpush1.bf16.msra.mxu0 0
        %364 = vmatprep.subr.bf16.mxu0 0
        %365 = vmatpush1.bf16.msra.mxu0 0
        %366 = vmatprep.subr.bf16.mxu0 0
        %367 = vmatpush1.bf16.msra.mxu0 0
        %368 = vmatprep.subr.bf16.mxu0 0
        %369 = vmatpush1.bf16.msra.mxu0 0
        %370 = vmatprep.mubr.bf16.mxu0 0
        %371 = vmatmul.mubr.bf16.gmra.mrb[0].mxu0 %v281
        %v372 = vpop.f32.mrb[0].mxu0
        %v373 = vadd.f32 %v288, %v372
        %v374 = vpop.f32.mrb[0].mxu0
        %v375 = vpop.f32.mrb[0].mxu0
        %v376 = vpop.f32.mrb[0].mxu0
        %377 = vdwg.mxu0
        %v378 = vmax.f32 %v373, 0.0
        %s379 = scalar_lea.vmem [#allocation4], 128
        %v380 = vld [vmem:[%s379] sm:$0xf]
        %v381 = vld [vmem:[%s379 + $0x4] sm:$0xf]
        %v382 = vld [vmem:[%s379 + $0x8] sm:$0xf]
        %v383 = vld [vmem:[%s379 + $0xc] sm:$0xf]
        %v384 = vld [vmem:[%s379 + $0x10] sm:$0xf]
        %v385 = vld [vmem:[%s379 + $0x14] sm:$0xf]
        %v386 = vld [vmem:[%s379 + $0x18] sm:$0xf]
        %v387 = vld [vmem:[%s379 + $0x1c] sm:$0xf]
        %v388 = vld [vmem:[%s379 + $0x20] sm:$0xf]
        %v389 = vld [vmem:[%s379 + $0x24] sm:$0xf]
        %v390 = vld [vmem:[%s379 + $0x28] sm:$0xf]
        %v391 = vld [vmem:[%s379 + $0x2c] sm:$0xf]
        %v392 = vld [vmem:[%s379 + $0x30] sm:$0xf]
        %v393 = vld [vmem:[%s379 + $0x34] sm:$0xf]
        %v394 = vld [vmem:[%s379 + $0x38] sm:$0xf]
        %v395 = vld [vmem:[%s379 + $0x3c] sm:$0xf]
        %v396 = vpack.c.bf16 %v378, %v378
        %s397 = scalar_lea.vmem %s2, 2
        %v398 = vld [vmem:[%s397] sm:$0x1]
        %v400 = vlaneseq
        %v401 = vshrl.u32 %v400, 7
        %v402 = vsub.s32 0, %v401
        %v403 = vrot.slane %v398, %v402
        %v421 = vunpack.c.l.b16 %v380
        %v422 = vunpack.c.l.b16 %v381
        %v423 = vunpack.c.l.b16 %v382
        %v424 = vunpack.c.l.b16 %v383
        %v425 = vunpack.c.l.b16 %v384
        %v426 = vunpack.c.l.b16 %v385
        %v427 = vunpack.c.l.b16 %v386
        %v428 = vunpack.c.l.b16 %v387
        %v429 = vunpack.c.l.b16 %v388
        %v430 = vunpack.c.l.b16 %v389
        %v431 = vunpack.c.l.b16 %v390
        %v432 = vunpack.c.l.b16 %v391
        %v433 = vunpack.c.l.b16 %v392
        %v434 = vunpack.c.l.b16 %v393
        %v435 = vunpack.c.l.b16 %v394
        %v436 = vunpack.c.l.b16 %v395
        %v437 = vpack.c.b16 %v422, %v421
        %v438 = vpack.c.b16 %v424, %v423
        %v439 = vpack.c.b16 %v426, %v425
        %v440 = vpack.c.b16 %v428, %v427
        %v441 = vpack.c.b16 %v430, %v429
        %v442 = vpack.c.b16 %v432, %v431
        %v443 = vpack.c.b16 %v434, %v433
        %v444 = vpack.c.b16 %v436, %v435
        %453 = vmatprep.subr.bf16.mxu0 0
        %454 = vmatpush1.bf16.msra.mxu0 %v437
        %455 = vmatprep.subr.bf16.mxu0 0
        %456 = vmatpush1.bf16.msra.mxu0 %v438
        %457 = vmatprep.subr.bf16.mxu0 0
        %458 = vmatpush1.bf16.msra.mxu0 %v439
        %459 = vmatprep.subr.bf16.mxu0 0
        %460 = vmatpush1.bf16.msra.mxu0 %v440
        %461 = vmatprep.subr.bf16.mxu0 0
        %462 = vmatpush1.bf16.msra.mxu0 %v441
        %463 = vmatprep.subr.bf16.mxu0 0
        %464 = vmatpush1.bf16.msra.mxu0 %v442
        %465 = vmatprep.subr.bf16.mxu0 0
        %466 = vmatpush1.bf16.msra.mxu0 %v443
        %467 = vmatprep.subr.bf16.mxu0 0
        %468 = vmatpush1.bf16.msra.mxu0 %v444
        %469 = vmatprep.subr.bf16.mxu0 0
        %470 = vmatpush1.bf16.msra.mxu0 0
        %471 = vmatprep.subr.bf16.mxu0 0
        %472 = vmatpush1.bf16.msra.mxu0 0
        %473 = vmatprep.subr.bf16.mxu0 0
        %474 = vmatpush1.bf16.msra.mxu0 0
        %475 = vmatprep.subr.bf16.mxu0 0
        %476 = vmatpush1.bf16.msra.mxu0 0
        %477 = vmatprep.subr.bf16.mxu0 0
        %478 = vmatpush1.bf16.msra.mxu0 0
        %479 = vmatprep.subr.bf16.mxu0 0
        %480 = vmatpush1.bf16.msra.mxu0 0
        %481 = vmatprep.subr.bf16.mxu0 0
        %482 = vmatpush1.bf16.msra.mxu0 0
        %483 = vmatprep.subr.bf16.mxu0 0
        %484 = vmatpush1.bf16.msra.mxu0 0
        %485 = vmatprep.mubr.bf16.mxu0 0
        %486 = vmatmul.mubr.bf16.gmra.mrb[0].mxu0 %v396
        %v487 = vpop.f32.mrb[0].mxu0
        %v488 = vadd.f32 %v403, %v487
        %v489 = vpop.f32.mrb[0].mxu0
        %v490 = vpop.f32.mrb[0].mxu0
        %v491 = vpop.f32.mrb[0].mxu0
        %492 = vdwg.mxu0
        %v493 = vmax.f32 %v488, 0.0
        %494 = vst [vmem:[%s200] sm:$0xff] %v493
        %p495 = scmp.lt.s32.totalorder %s18, 1
        %s496 = scalar_select %p495, %s18, 1
        %s497 = smul.addr %s496, 8
        %s498 = scalar_lea.vmem %s3, %s497
        // Predicated region
        $region41: #{_lambda_.1} parent=31 // pred_check
          %p499 = pneg %p104
        $region42: #{_lambda_.1} parent=31 // pred_check_branch
          %501 = sbr.rel (%p499) target = $region44
        $region43: #{_lambda_.1} parent=31 // pred_region
          _
        $region44: #{_lambda_.1} parent=31 // pred_fallthru
          _
      $region32: #{_lambda_.1} parent=5 // pred_fallthru
        _
      %p502 = scmp.le.s32.totalorder 2, %s13
      // Predicated region
      $region45: #{_lambda_.1} parent=5 // pred_check
        %p503 = pneg %p502
      $region46: #{_lambda_.1} parent=5 // pred_check_branch
        %505 = sbr.rel (%p503) target = $region48
      $region47: #{_lambda_.1} parent=5 // pred_region
        %s506 = ssub.s32 %s13, 2
        // Predicated region
        $region49: #{_lambda_.1} parent=47 // pred_check
          %p507 = pneg %p110
        $region50: #{_lambda_.1} parent=47 // pred_check_branch
          %509 = sbr.rel (%p507) target = $region52
        $region51: #{_lambda_.1} parent=47 // pred_region
          %p510 = scmp.lt.s32.totalorder %s19, 1
          %s511 = scalar_select %p510, %s19, 1
          %s512 = smul.addr %s511, 8
          %s513 = scalar_lea.vmem %s3, %s512
        $region52: #{_lambda_.1} parent=47 // pred_fallthru
          _
      $region48: #{_lambda_.1} parent=5 // pred_fallthru
        _
    $region6: #{_lambda_.1} parent=1 // loop_footer
      %s17 = sadd.s32 1, %s13
    $region7: #{_lambda_.1} parent=1 // loop_footer_branch
      %12 = sbr.rel target = $region3
    $region8: #{_lambda_.1} parent=1 // loop_exit
      _
    %514 = vsyncpa [#allocation3], 1
    %s515 = scalar_lea.sflag [#allocation3], 1
    %516 = vsyncpa %s515, 1
    %517 = vsyncpa [#allocation5], 1

</llo_original>
